<compile_context>
chip_gen: v6e
topology: v6e:2x2x1
jax: 0.10.0
libtpu: 0.0.40
codegen_flags: <defaults>
</compile_context>

<pallas_src>
import jax
import jax.numpy as jnp
from jax.experimental import pallas as pl
from jax.experimental.pallas import tpu as pltpu

# ---- Module hyper-parameters (small, consistent with the module) ---------------
EMB_DIM = 32                        # must be a multiple of 8 (sublane tiling)
NUM_ENT = 20
NUM_REL = 10
MAX_ARITY = 6                       # e1 .. e6
NUM_FACTORS = MAX_ARITY + 1         # relation + 6 entities
BATCH = 128                         # lane-dense demo batch (one grid step)
LANE_TILE = 128                     # batch examples per grid step (lane width)


# ---- Pallas kernel -------------------------------------------------------------
def mdistmult_kernel(x_ref, o_ref):
    # x_ref : VMEM (NUM_FACTORS, D, TB)  — slab 0 = r, slabs 1..6 = e1..e6,
    #                                       emb_dim on sublanes, batch on lanes.
    # o_ref : VMEM (1, TB)               — per-example scores, lane-dense store.
    f = [x_ref[p].astype(jnp.float32) for p in range(NUM_FACTORS)]
    # Depth-3 tree product instead of a 6-deep serial VPU chain.
    prod = ((f[0] * f[1]) * (f[2] * f[3])) * ((f[4] * f[5]) * f[6])
    # hidden_drop is identity in eval mode.
    o_ref[...] = jnp.sum(prod, axis=0, keepdims=True)   # sublane reduce -> (1, TB)


def mdistmult_forward(E, R, r_idx, e_idx_all, *, lane_tile=LANE_TILE):
    """E: (num_ent, D), R: (num_rel, D), r_idx: (B,), e_idx_all: (6, B) -> (B,)."""
    B = r_idx.shape[0]
    D = E.shape[1]
    assert D % 8 == 0, "emb_dim must be a multiple of 8 (sublane tiling)"

    # Glue: embedding gathers (tiny at these sizes), stacked on a leading factor
    # axis and transposed so batch lands on the lane axis.  No dtype upcast here.
    x = jnp.concatenate([R[r_idx][None],       # (1, B, D)
                         E[e_idx_all]],        # (6, B, D)
                        axis=0)                # (7, B, D)
    x = jnp.swapaxes(x, 1, 2)                  # (7, D, B)  — batch -> lanes

    # Pad batch (lane axis) to a multiple of the lane tile; padded columns give 0.
    Bp = pl.cdiv(B, lane_tile) * lane_tile
    if Bp != B:
        x = jnp.pad(x, ((0, 0), (0, 0), (0, Bp - B)))

    grid = (Bp // lane_tile,)                  # =(1,) at small batch; grows with B
    out = pl.pallas_call(
        mdistmult_kernel,
        out_shape=jax.ShapeDtypeStruct((1, Bp), jnp.float32),
        grid=grid,
        in_specs=[pl.BlockSpec((NUM_FACTORS, D, lane_tile), lambda i: (0, 0, i))],
        out_specs=pl.BlockSpec((1, lane_tile), lambda i: (0, i)),
        compiler_params=pltpu.CompilerParams(
            dimension_semantics=("parallel",)),  # v7x 2-TC split once grid > 1
    )(x)
    return out[0, :B]


# ---- Pure-JAX reference (mirrors torch semantics) ------------------------------
def mdistmult_reference(E, R, r_idx, e_idx_all):
    acc = R[r_idx].astype(jnp.float32)
    for p in range(e_idx_all.shape[0]):
        acc = acc * E[e_idx_all[p]].astype(jnp.float32)
    return jnp.sum(acc, axis=1)


# ---- Deterministic parameter / input construction ------------------------------
def make_params(key):
    ke, kr = jax.random.split(key, 2)
    E = jax.random.normal(ke, (NUM_ENT, EMB_DIM), jnp.float32) * 0.3
    E = E.at[0].set(1.0)                       # MDistMult.init(): row 0 = ones
    R = jax.random.normal(kr, (NUM_REL, EMB_DIM), jnp.float32) * 0.3
    R = R.at[0].set(1.0)
    return E, R


if __name__ == "__main__":
    key = jax.random.PRNGKey(0)
    kp, ki, kr = jax.random.split(key, 3)
    E, R = make_params(kp)

    r_idx = jax.random.randint(kr, (BATCH,), 1, NUM_REL)
    e_idx_all = jax.random.randint(ki, (MAX_ARITY, BATCH), 1, NUM_ENT)  # e1..e6

    out = jax.jit(mdistmult_forward)(E, R, r_idx, e_idx_all)
    out = jax.block_until_ready(out)

    ref = mdistmult_reference(E, R, r_idx, e_idx_all)
    assert out.shape == (BATCH,)
    assert jnp.allclose(out, ref, rtol=1e-5, atol=1e-6), (out, ref)
    print("KERNEL_OK")
</pallas_src>

<mosaic_0001>
module attributes {stable_mosaic.version = 11 : i64} {
  func.func @mdistmult_kernel(%arg0: i32, %arg1: memref<7x32x128xf32, #tpu.memory_space<vmem>>, %arg2: memref<1x128xf32, #tpu.memory_space<vmem>>) attributes {dimension_semantics = [#tpu.dimension_semantics<parallel>], iteration_bounds = array<i64: 1>, scalar_prefetch = 0 : i64, scratch_operands = 0 : i64, tpu.core_type = #tpu.core_type<tc>, window_params = [{transform_indices = @transform_0, window_bounds = array<i64: 7, 32, 128>}, {transform_indices = @transform_1, window_bounds = array<i64: 1, 128>}]} {
    %c0 = arith.constant 0 : index
    %c0_0 = arith.constant 0 : index
    %c0_1 = arith.constant 0 : index
    %0 = vector.load %arg1[%c0, %c0_0, %c0_1] : memref<7x32x128xf32, #tpu.memory_space<vmem>>, vector<1x32x128xf32>
    %1 = vector.shape_cast %0 : vector<1x32x128xf32> to vector<32x128xf32>
    %c1 = arith.constant 1 : index
    %c0_2 = arith.constant 0 : index
    %c0_3 = arith.constant 0 : index
    %2 = vector.load %arg1[%c1, %c0_2, %c0_3] : memref<7x32x128xf32, #tpu.memory_space<vmem>>, vector<1x32x128xf32>
    %3 = vector.shape_cast %2 : vector<1x32x128xf32> to vector<32x128xf32>
    %c2 = arith.constant 2 : index
    %c0_4 = arith.constant 0 : index
    %c0_5 = arith.constant 0 : index
    %4 = vector.load %arg1[%c2, %c0_4, %c0_5] : memref<7x32x128xf32, #tpu.memory_space<vmem>>, vector<1x32x128xf32>
    %5 = vector.shape_cast %4 : vector<1x32x128xf32> to vector<32x128xf32>
    %c3 = arith.constant 3 : index
    %c0_6 = arith.constant 0 : index
    %c0_7 = arith.constant 0 : index
    %6 = vector.load %arg1[%c3, %c0_6, %c0_7] : memref<7x32x128xf32, #tpu.memory_space<vmem>>, vector<1x32x128xf32>
    %7 = vector.shape_cast %6 : vector<1x32x128xf32> to vector<32x128xf32>
    %c4 = arith.constant 4 : index
    %c0_8 = arith.constant 0 : index
    %c0_9 = arith.constant 0 : index
    %8 = vector.load %arg1[%c4, %c0_8, %c0_9] : memref<7x32x128xf32, #tpu.memory_space<vmem>>, vector<1x32x128xf32>
    %9 = vector.shape_cast %8 : vector<1x32x128xf32> to vector<32x128xf32>
    %c5 = arith.constant 5 : index
    %c0_10 = arith.constant 0 : index
    %c0_11 = arith.constant 0 : index
    %10 = vector.load %arg1[%c5, %c0_10, %c0_11] : memref<7x32x128xf32, #tpu.memory_space<vmem>>, vector<1x32x128xf32>
    %11 = vector.shape_cast %10 : vector<1x32x128xf32> to vector<32x128xf32>
    %c6 = arith.constant 6 : index
    %c0_12 = arith.constant 0 : index
    %c0_13 = arith.constant 0 : index
    %12 = vector.load %arg1[%c6, %c0_12, %c0_13] : memref<7x32x128xf32, #tpu.memory_space<vmem>>, vector<1x32x128xf32>
    %13 = vector.shape_cast %12 : vector<1x32x128xf32> to vector<32x128xf32>
    %14 = arith.mulf %1, %3 : vector<32x128xf32>
    %15 = arith.mulf %5, %7 : vector<32x128xf32>
    %16 = arith.mulf %14, %15 : vector<32x128xf32>
    %17 = arith.mulf %9, %11 : vector<32x128xf32>
    %18 = arith.mulf %17, %13 : vector<32x128xf32>
    %19 = arith.mulf %16, %18 : vector<32x128xf32>
    %cst = arith.constant dense<0.000000e+00> : vector<128xf32>
    %20 = vector.multi_reduction <add>, %19, %cst [0] : vector<32x128xf32> to vector<128xf32>
    %21 = vector.shape_cast %20 : vector<128xf32> to vector<1x128xf32>
    %c0_14 = arith.constant 0 : index
    %c0_15 = arith.constant 0 : index
    %22 = vector.load %arg2[%c0_14, %c0_15] : memref<1x128xf32, #tpu.memory_space<vmem>>, vector<1x128xf32>
    tpu.vector_store %arg2[%c0_14, %c0_15], %21 {strides = array<i32>} : memref<1x128xf32, #tpu.memory_space<vmem>>, vector<1x128xf32>,
    return
  }
  func.func @transform_0(%arg0: i32) -> (i32, i32, i32) {
    %c0_i32 = arith.constant 0 : i32
    %c0_i32_0 = arith.constant 0 : i32
    %c0_i32_1 = arith.constant 0 : i32
    return %c0_i32, %c0_i32_0, %arg0 : i32, i32, i32
  }
  func.func @transform_1(%arg0: i32) -> (i32, i32) {
    %c0_i32 = arith.constant 0 : i32
    %c0_i32_0 = arith.constant 0 : i32
    return %c0_i32, %arg0 : i32, i32
  }
}

</mosaic_0001>

<llo_original>
// kernel: mdistmult_forward.1
$region0: #{mdistmult_forward.1}
  #allocation0 [shape = 'u32[]', space=smem, size = 0x4, offset = 0x4, fixed_abs, tag = 'smem constant byte address 0x4 - core index']
  #allocation1 [shape = 'u32[144,128]{1,0:T(1,128)}', space=vmem, size = 0x12000, scoped, tag = 'internal scratch']
  %s0 = inlined_call_operand.vmem [shape: f32[7,32,128], index: 0, kind: input, shape index: {}]
  %s1 = inlined_call_operand.hbm [shape: f32[1,128], index: 1, kind: output, shape index: {}]
  %s2 = sld [smem:[#allocation0]]
  $region14: #{mdistmult_forward.1} parent=0
    _
  %s4 = ssub.s32 1, %s2
  %s5 = scalar_select 0, %s4, %s2
  $region1: #{mdistmult_forward.1} parent=0
    #allocation2 [shape = 'u8[512]{0}', space=vmem, size = 0x400, scoped, tag = 'output window, operand 0, single buffered']
    #allocation3 [shape = 's32[1]{0}', space=sflag, size = 0x4, scoped, tag = 'scoped memory for mdistmult_forward.1']
    %6 = vsyncpa [#allocation3], 0
    // Predicated region
    $region2: #{mdistmult_forward.1} parent=1 // pred_check
      _
    $region3: #{mdistmult_forward.1} parent=1 // pred_check_branch
      %8 = sbr.rel (0) target = $region5
    $region4: #{mdistmult_forward.1} parent=1 // pred_region
      _
    $region5: #{mdistmult_forward.1} parent=1 // pred_fallthru
      _
    %v9 = vld [vmem:[%s0] sm:$0xff]
    %v10 = vld [vmem:[%s0 + $0x8] sm:$0xff]
    %v11 = vld [vmem:[%s0 + $0x10] sm:$0xff]
    %v12 = vld [vmem:[%s0 + $0x18] sm:$0xff]
    %s13 = scalar_lea.vmem %s0, 32
    %v14 = vld [vmem:[%s13] sm:$0xff]
    %v15 = vld [vmem:[%s13 + $0x8] sm:$0xff]
    %v16 = vld [vmem:[%s13 + $0x10] sm:$0xff]
    %v17 = vld [vmem:[%s13 + $0x18] sm:$0xff]
    %s18 = scalar_lea.vmem %s0, 64
    %v19 = vld [vmem:[%s18] sm:$0xff]
    %v20 = vld [vmem:[%s18 + $0x8] sm:$0xff]
    %v21 = vld [vmem:[%s18 + $0x10] sm:$0xff]
    %v22 = vld [vmem:[%s18 + $0x18] sm:$0xff]
    %s23 = scalar_lea.vmem %s0, 96
    %v24 = vld [vmem:[%s23] sm:$0xff]
    %v25 = vld [vmem:[%s23 + $0x8] sm:$0xff]
    %v26 = vld [vmem:[%s23 + $0x10] sm:$0xff]
    %v27 = vld [vmem:[%s23 + $0x18] sm:$0xff]
    %s28 = scalar_lea.vmem %s0, 128
    %v29 = vld [vmem:[%s28] sm:$0xff]
    %v30 = vld [vmem:[%s28 + $0x8] sm:$0xff]
    %v31 = vld [vmem:[%s28 + $0x10] sm:$0xff]
    %v32 = vld [vmem:[%s28 + $0x18] sm:$0xff]
    %s33 = scalar_lea.vmem %s0, 160
    %v34 = vld [vmem:[%s33] sm:$0xff]
    %v35 = vld [vmem:[%s33 + $0x8] sm:$0xff]
    %v36 = vld [vmem:[%s33 + $0x10] sm:$0xff]
    %v37 = vld [vmem:[%s33 + $0x18] sm:$0xff]
    %s38 = scalar_lea.vmem %s0, 192
    %v39 = vld [vmem:[%s38] sm:$0xff]
    %v40 = vld [vmem:[%s38 + $0x8] sm:$0xff]
    %v41 = vld [vmem:[%s38 + $0x10] sm:$0xff]
    %v42 = vld [vmem:[%s38 + $0x18] sm:$0xff]
    %v43 = vmul.f32 %v9, %v14
    %v44 = vmul.f32 %v10, %v15
    %v45 = vmul.f32 %v11, %v16
    %v46 = vmul.f32 %v12, %v17
    %v47 = vmul.f32 %v19, %v24
    %v48 = vmul.f32 %v20, %v25
    %v49 = vmul.f32 %v21, %v26
    %v50 = vmul.f32 %v22, %v27
    %v51 = vmul.f32 %v43, %v47
    %v52 = vmul.f32 %v44, %v48
    %v53 = vmul.f32 %v45, %v49
    %v54 = vmul.f32 %v46, %v50
    %v55 = vmul.f32 %v29, %v34
    %v56 = vmul.f32 %v30, %v35
    %v57 = vmul.f32 %v31, %v36
    %v58 = vmul.f32 %v32, %v37
    %v59 = vmul.f32 %v55, %v39
    %v60 = vmul.f32 %v56, %v40
    %v61 = vmul.f32 %v57, %v41
    %v62 = vmul.f32 %v58, %v42
    %v63 = vmul.f32 %v51, %v59
    %v64 = vmul.f32 %v52, %v60
    %v65 = vmul.f32 %v53, %v61
    %v66 = vmul.f32 %v54, %v62
    %v67 = vadd.f32 %v63, %v64
    %v68 = vadd.f32 %v67, %v65
    %v69 = vadd.f32 %v68, %v66
    %v70 = vrot.slane %v69, 4
    %v71 = vadd.f32 %v69, %v70
    %v72 = vrot.slane %v71, 2
    %v73 = vadd.f32 %v71, %v72
    %v74 = vrot.slane %v73, 1
    %v75 = vadd.f32 %v73, %v74
    %76 = vst [vmem:[#allocation2] sm:$0x1] %v75
    // Predicated region
    $region6: #{mdistmult_forward.1} parent=1 // pred_check
      _
    $region7: #{mdistmult_forward.1} parent=1 // pred_check_branch
      %78 = sbr.rel (0) target = $region9
    $region8: #{mdistmult_forward.1} parent=1 // pred_region
      %s80 = ssub.s32 16, 16
      %81 = vsyncadd [#allocation3], %s80
      %s83 = sshll.u32 [#allocation2], 4
      %s84 = int_to_ptr.vmem [resolvable:$true] %s83
      %86 = dma.vmem_to_hbm [thread:$0]  %s84, 16, %s1, [#allocation3]
    $region9: #{mdistmult_forward.1} parent=1 // pred_fallthru
      _
    // Predicated region
    $region10: #{mdistmult_forward.1} parent=1 // pred_check
      _
    $region11: #{mdistmult_forward.1} parent=1 // pred_check_branch
      %88 = sbr.rel (0) target = $region13
    $region12: #{mdistmult_forward.1} parent=1 // pred_region
      %89 = dma.done [#allocation3], 16
    $region13: #{mdistmult_forward.1} parent=1 // pred_fallthru
      _
    %90 = vsyncpa [#allocation3], 1

</llo_original>
